<compile_context>
chip_gen: v5e
topology: v5e:2x2
jax: 0.10.0
libtpu: 0.0.40
codegen_flags: <defaults>
</compile_context>

<pallas_src>
import numpy as np
import jax
import jax.numpy as jnp
from jax.experimental import pallas as pl
from jax.experimental.pallas import tpu as pltpu


# ----------------------------------------------------------------------------
# Autoregressive path
# ----------------------------------------------------------------------------
def _ar_decoder_kernel(x_ref, wbase_ref, wfb_ref, b_ref, t_ref, out_ref, logits_ref):
    """x:(B,IN)  wbase:(OF,IN)  wfb:(OF,OF) causal  b:(1,OF)  t:(B,OF) thresholds."""
    OF = wfb_ref.shape[0]

    # Base logits for all output units with a single MXU matmul.
    running = jax.lax.dot_general(
        x_ref[...], wbase_ref[...],
        dimension_numbers=(((1,), (1,)), ((), ())),
        preferred_element_type=jnp.float32,
    ) + b_ref[...]                                            # (B, OF)

    t = t_ref[...]                                            # (B, OF)

    # Serial autoregressive recurrence (unit i consumes samples of units < i).
    # Per step: one (B,1) compare + one broadcast FMA onto the (B,OF) tile.
    # Feedback row i only touches lanes > i, so running[:, i] is final at step i.
    # NOTE: static unroll is fine for small OF; for OF >> 16 switch to
    # lax.fori_loop(unroll=4..8) with a VMEM-resident running tile.
    for i in range(OF - 1):
        s_i = (running[:, i:i + 1] > t[:, i:i + 1]).astype(jnp.float32)   # (B, 1)
        running = running + s_i * wfb_ref[i:i + 1, :]                     # (B, OF)

    # Lane-dense stores, once.  out[:, i] = 1{u < sigmoid(l_i)} == 1{l_i > logit(u)}.
    logits_ref[...] = running
    out_ref[...] = (running > t).astype(jnp.float32)


def _ar_forward_with_uniforms(x, conv_weight, conv_bias, u):
    """x:(B,IN) f32, conv_weight:(OF,1,IN+OF-1), conv_bias:(OF,), u:(B,OF) in [0,1).
    Returns (out, logits), each (B, OF) f32 -- matches DecoderLayer.forward
    with autoregress=True (in_features >= 1; for in_features==0 pass x=zeros(B,1))."""
    x = x.astype(jnp.float32)
    B, IN = x.shape
    OF = conv_weight.shape[0]
    K = conv_weight.shape[2]
    assert K == IN + OF - 1

    w2d = conv_weight[:, 0, :].astype(jnp.float32)            # (OF, K)
    wbase = w2d[:, :IN]                                       # (OF, IN) input weights
    # Causal feedback table: wfb[j, i] = w[i, IN+j] for i > j, else 0.
    wfb = jnp.zeros((OF, OF), jnp.float32)
    if OF > 1:
        wfb = wfb.at[:OF - 1, :].set(w2d[:, IN:].T)
        causal = (jnp.arange(OF)[None, :] > jnp.arange(OF)[:, None]).astype(jnp.float32)
        wfb = wfb * causal
    b2d = conv_bias.reshape(1, OF).astype(jnp.float32)

    # Bernoulli in the logit domain: u < sigmoid(l)  <=>  l > logit(u).
    u = u.astype(jnp.float32)
    t = jnp.log(u) - jnp.log1p(-u)                            # (B, OF)

    out_shapes = (jax.ShapeDtypeStruct((B, OF), jnp.float32),
                  jax.ShapeDtypeStruct((B, OF), jnp.float32))

    return pl.pallas_call(
        _ar_decoder_kernel,
        out_shape=out_shapes,
        grid=(1,),
        in_specs=[
            pl.BlockSpec((B, IN), lambda i: (0, 0)),
            pl.BlockSpec((OF, IN), lambda i: (0, 0)),
            pl.BlockSpec((OF, OF), lambda i: (0, 0)),
            pl.BlockSpec((1, OF), lambda i: (0, 0)),
            pl.BlockSpec((B, OF), lambda i: (0, 0)),
        ],
        out_specs=(
            pl.BlockSpec((B, OF), lambda i: (0, 0)),
            pl.BlockSpec((B, OF), lambda i: (0, 0)),
        ),
        compiler_params=pltpu.CompilerParams(dimension_semantics=("arbitrary",)),
    )(x, wbase, wfb, b2d, t)


def decoder_layer_forward_autoregressive(x, conv_weight, conv_bias, key):
    # TODO(synk): torch.distributions.Bernoulli uses torch's RNG stream; here the
    # uniforms come from jax.random (same distribution, different random numbers).
    B = x.shape[0]
    OF = conv_weight.shape[0]
    u = jax.random.uniform(key, (B, OF), jnp.float32)
    return _ar_forward_with_uniforms(x, conv_weight, conv_bias, u)


# ----------------------------------------------------------------------------
# Non-autoregressive path: out = activation(Linear(x)); default activation = id.
# ----------------------------------------------------------------------------
def _linear_kernel(x_ref, w_ref, b_ref, o_ref):
    # TODO(synk): arbitrary user activation callables are not implemented; the
    # module default (identity) is what this kernel computes.
    o_ref[...] = jax.lax.dot_general(
        x_ref[...], w_ref[...],
        dimension_numbers=(((1,), (1,)), ((), ())),   # contract IN against IN
        preferred_element_type=jnp.float32,
    ) + b_ref[...]


def decoder_layer_forward_linear(x, weight, bias):
    """x: (B, IN), weight: (OF, IN), bias: (OF,). Returns (B, OF)."""
    B, IN = x.shape
    OF = weight.shape[0]
    return pl.pallas_call(
        _linear_kernel,
        out_shape=jax.ShapeDtypeStruct((B, OF), jnp.float32),
        grid=(1,),
        in_specs=[
            pl.BlockSpec((B, IN), lambda i: (0, 0)),
            pl.BlockSpec((OF, IN), lambda i: (0, 0)),
            pl.BlockSpec((1, OF), lambda i: (0, 0)),
        ],
        out_specs=pl.BlockSpec((B, OF), lambda i: (0, 0)),
        compiler_params=pltpu.CompilerParams(dimension_semantics=("arbitrary",)),
    )(x.astype(jnp.float32), weight.astype(jnp.float32),
      bias.reshape(1, OF).astype(jnp.float32))


# ----------------------------------------------------------------------------
if __name__ == "__main__":
    key = jax.random.PRNGKey(0)
    B, IN, OF = 8, 4, 8
    K = IN + OF - 1
    k1, k2, k3, k4, k5, k6, k7 = jax.random.split(key, 7)

    x = jax.random.normal(k1, (B, IN), jnp.float32)
    conv_w = jax.random.normal(k2, (OF, 1, K), jnp.float32) * 0.1   # Conv1d weight
    conv_b = jax.random.normal(k3, (OF,), jnp.float32) * 0.1        # Conv1d bias
    u = jax.random.uniform(k6, (B, OF), jnp.float32)                # Bernoulli uniforms

    out, logits = jax.block_until_ready(_ar_forward_with_uniforms(x, conv_w, conv_b, u))

    # --- correctness checks against the PyTorch forward semantics (numpy) -----
    xs, ws, bs, us = map(np.asarray, (x, conv_w, conv_b, u))
    out_np, log_np = np.asarray(out), np.asarray(logits)

    # (1) logit recurrence: given the kernel's own samples, the logits must equal
    #     sum_j w[i,0,:IN+i] * cat([x, out[:, :i]]) + b[i]
    ref_log = np.zeros((B, OF), np.float32)
    for i in range(OF):
        feat = np.concatenate([xs, out_np[:, :i]], axis=1)          # (B, IN+i)
        ref_log[:, i] = (ws[i, 0, :IN + i] * feat).sum(axis=1) + bs[i]
    assert np.allclose(log_np, ref_log, atol=1e-4), "logit recurrence mismatch"

    # (2) sampling rule: out[:, i] = 1{ u[:, i] < sigmoid(logits[:, i]) }
    p = 1.0 / (1.0 + np.exp(-log_np))
    expect = (us < p).astype(np.float32)
    near = np.abs(p - us) < 1e-6                                    # fp-threshold slack
    assert np.all((out_np == expect) | near), "Bernoulli sampling rule mismatch"

    assert out.shape == (B, OF) and logits.shape == (B, OF)
    assert bool(jnp.all((out == 0.0) | (out == 1.0)))
    assert bool(jnp.all(jnp.isfinite(logits)))

    # public API (draws uniforms internally)
    out2, logits2 = jax.block_until_ready(
        decoder_layer_forward_autoregressive(x, conv_w, conv_b, k7))
    assert out2.shape == (B, OF) and bool(jnp.all((out2 == 0.0) | (out2 == 1.0)))

    # non-autoregressive path: plain affine map, checkable against jnp reference
    lin_w = jax.random.normal(k4, (OF, IN), jnp.float32) * 0.1
    lin_b = jax.random.normal(k5, (OF,), jnp.float32) * 0.1
    y = jax.block_until_ready(decoder_layer_forward_linear(x, lin_w, lin_b))
    assert bool(jnp.allclose(y, x @ lin_w.T + lin_b, atol=1e-4))

    print("KERNEL_OK")
</pallas_src>

<mosaic_0001>
module attributes {stable_mosaic.version = 11 : i64} {
  func.func @_ar_decoder_kernel(%arg0: i32, %arg1: memref<8x4xf32, #tpu.memory_space<vmem>>, %arg2: memref<8x4xf32, #tpu.memory_space<vmem>>, %arg3: memref<8x8xf32, #tpu.memory_space<vmem>>, %arg4: memref<1x8xf32, #tpu.memory_space<vmem>>, %arg5: memref<8x8xf32, #tpu.memory_space<vmem>>, %arg6: memref<8x8xf32, #tpu.memory_space<vmem>>, %arg7: memref<8x8xf32, #tpu.memory_space<vmem>>) attributes {dimension_semantics = [#tpu.dimension_semantics<arbitrary>], iteration_bounds = array<i64: 1>, scalar_prefetch = 0 : i64, scratch_operands = 0 : i64, tpu.core_type = #tpu.core_type<tc>, window_params = [{pipeline_mode = #tpu.pipeline_mode<synchronous>, transform_indices = @transform_0, window_bounds = array<i64: 8, 4>}, {pipeline_mode = #tpu.pipeline_mode<synchronous>, transform_indices = @transform_1, window_bounds = array<i64: 8, 4>}, {pipeline_mode = #tpu.pipeline_mode<synchronous>, transform_indices = @transform_2, window_bounds = array<i64: 8, 8>}, {pipeline_mode = #tpu.pipeline_mode<synchronous>, transform_indices = @transform_3, window_bounds = array<i64: 1, 8>}, {pipeline_mode = #tpu.pipeline_mode<synchronous>, transform_indices = @transform_4, window_bounds = array<i64: 8, 8>}, {pipeline_mode = #tpu.pipeline_mode<synchronous>, transform_indices = @transform_5, window_bounds = array<i64: 8, 8>}, {pipeline_mode = #tpu.pipeline_mode<synchronous>, transform_indices = @transform_6, window_bounds = array<i64: 8, 8>}]} {
    %c0 = arith.constant 0 : index
    %c0_0 = arith.constant 0 : index
    %0 = vector.load %arg1[%c0, %c0_0] : memref<8x4xf32, #tpu.memory_space<vmem>>, vector<8x4xf32>
    %c0_1 = arith.constant 0 : index
    %c0_2 = arith.constant 0 : index
    %1 = vector.load %arg2[%c0_1, %c0_2] : memref<8x4xf32, #tpu.memory_space<vmem>>, vector<8x4xf32>
    %cst = arith.constant dense<0.000000e+00> : vector<8x8xf32>
    %2 = tpu.matmul %0, %1, %cst {dimension_numbers = #tpu.dot_dimension_numbers<[1], [1], [0], [0], [0, 0, 1, 0], [], []>} : vector<8x4xf32>, vector<8x4xf32>, vector<8x8xf32> -> vector<8x8xf32>
    %c0_3 = arith.constant 0 : index
    %c0_4 = arith.constant 0 : index
    %3 = vector.load %arg4[%c0_3, %c0_4] : memref<1x8xf32, #tpu.memory_space<vmem>>, vector<1x8xf32>
    %4 = vector.broadcast %3 : vector<1x8xf32> to vector<8x8xf32>
    %5 = arith.addf %2, %4 : vector<8x8xf32>
    %c0_5 = arith.constant 0 : index
    %c0_6 = arith.constant 0 : index
    %6 = vector.load %arg5[%c0_5, %c0_6] : memref<8x8xf32, #tpu.memory_space<vmem>>, vector<8x8xf32>
    %7 = vector.extract_strided_slice %5 {offsets = [0, 0], sizes = [8, 1], strides = [1, 1]} : vector<8x8xf32> to vector<8x1xf32>
    %8 = vector.extract_strided_slice %6 {offsets = [0, 0], sizes = [8, 1], strides = [1, 1]} : vector<8x8xf32> to vector<8x1xf32>
    %9 = arith.cmpf ogt, %7, %8 : vector<8x1xf32>
    %10 = arith.extui %9 : vector<8x1xi1> to vector<8x1xi32>
    %11 = arith.sitofp %10 : vector<8x1xi32> to vector<8x1xf32>
    %c0_7 = arith.constant 0 : index
    %c0_8 = arith.constant 0 : index
    %12 = vector.load %arg3[%c0_7, %c0_8] : memref<8x8xf32, #tpu.memory_space<vmem>>, vector<1x8xf32>
    %13 = vector.broadcast %11 : vector<8x1xf32> to vector<8x8xf32>
    %14 = vector.broadcast %12 : vector<1x8xf32> to vector<8x8xf32>
    %15 = arith.mulf %13, %14 : vector<8x8xf32>
    %16 = arith.addf %5, %15 : vector<8x8xf32>
    %17 = vector.extract_strided_slice %16 {offsets = [0, 1], sizes = [8, 1], strides = [1, 1]} : vector<8x8xf32> to vector<8x1xf32>
    %18 = vector.extract_strided_slice %6 {offsets = [0, 1], sizes = [8, 1], strides = [1, 1]} : vector<8x8xf32> to vector<8x1xf32>
    %19 = arith.cmpf ogt, %17, %18 : vector<8x1xf32>
    %20 = arith.extui %19 : vector<8x1xi1> to vector<8x1xi32>
    %21 = arith.sitofp %20 : vector<8x1xi32> to vector<8x1xf32>
    %c1 = arith.constant 1 : index
    %c0_9 = arith.constant 0 : index
    %22 = vector.load %arg3[%c1, %c0_9] : memref<8x8xf32, #tpu.memory_space<vmem>>, vector<1x8xf32>
    %23 = vector.broadcast %21 : vector<8x1xf32> to vector<8x8xf32>
    %24 = vector.broadcast %22 : vector<1x8xf32> to vector<8x8xf32>
    %25 = arith.mulf %23, %24 : vector<8x8xf32>
    %26 = arith.addf %16, %25 : vector<8x8xf32>
    %27 = vector.extract_strided_slice %26 {offsets = [0, 2], sizes = [8, 1], strides = [1, 1]} : vector<8x8xf32> to vector<8x1xf32>
    %28 = vector.extract_strided_slice %6 {offsets = [0, 2], sizes = [8, 1], strides = [1, 1]} : vector<8x8xf32> to vector<8x1xf32>
    %29 = arith.cmpf ogt, %27, %28 : vector<8x1xf32>
    %30 = arith.extui %29 : vector<8x1xi1> to vector<8x1xi32>
    %31 = arith.sitofp %30 : vector<8x1xi32> to vector<8x1xf32>
    %c2 = arith.constant 2 : index
    %c0_10 = arith.constant 0 : index
    %32 = vector.load %arg3[%c2, %c0_10] : memref<8x8xf32, #tpu.memory_space<vmem>>, vector<1x8xf32>
    %33 = vector.broadcast %31 : vector<8x1xf32> to vector<8x8xf32>
    %34 = vector.broadcast %32 : vector<1x8xf32> to vector<8x8xf32>
    %35 = arith.mulf %33, %34 : vector<8x8xf32>
    %36 = arith.addf %26, %35 : vector<8x8xf32>
    %37 = vector.extract_strided_slice %36 {offsets = [0, 3], sizes = [8, 1], strides = [1, 1]} : vector<8x8xf32> to vector<8x1xf32>
    %38 = vector.extract_strided_slice %6 {offsets = [0, 3], sizes = [8, 1], strides = [1, 1]} : vector<8x8xf32> to vector<8x1xf32>
    %39 = arith.cmpf ogt, %37, %38 : vector<8x1xf32>
    %40 = arith.extui %39 : vector<8x1xi1> to vector<8x1xi32>
    %41 = arith.sitofp %40 : vector<8x1xi32> to vector<8x1xf32>
    %c3 = arith.constant 3 : index
    %c0_11 = arith.constant 0 : index
    %42 = vector.load %arg3[%c3, %c0_11] : memref<8x8xf32, #tpu.memory_space<vmem>>, vector<1x8xf32>
    %43 = vector.broadcast %41 : vector<8x1xf32> to vector<8x8xf32>
    %44 = vector.broadcast %42 : vector<1x8xf32> to vector<8x8xf32>
    %45 = arith.mulf %43, %44 : vector<8x8xf32>
    %46 = arith.addf %36, %45 : vector<8x8xf32>
    %47 = vector.extract_strided_slice %46 {offsets = [0, 4], sizes = [8, 1], strides = [1, 1]} : vector<8x8xf32> to vector<8x1xf32>
    %48 = vector.extract_strided_slice %6 {offsets = [0, 4], sizes = [8, 1], strides = [1, 1]} : vector<8x8xf32> to vector<8x1xf32>
    %49 = arith.cmpf ogt, %47, %48 : vector<8x1xf32>
    %50 = arith.extui %49 : vector<8x1xi1> to vector<8x1xi32>
    %51 = arith.sitofp %50 : vector<8x1xi32> to vector<8x1xf32>
    %c4 = arith.constant 4 : index
    %c0_12 = arith.constant 0 : index
    %52 = vector.load %arg3[%c4, %c0_12] : memref<8x8xf32, #tpu.memory_space<vmem>>, vector<1x8xf32>
    %53 = vector.broadcast %51 : vector<8x1xf32> to vector<8x8xf32>
    %54 = vector.broadcast %52 : vector<1x8xf32> to vector<8x8xf32>
    %55 = arith.mulf %53, %54 : vector<8x8xf32>
    %56 = arith.addf %46, %55 : vector<8x8xf32>
    %57 = vector.extract_strided_slice %56 {offsets = [0, 5], sizes = [8, 1], strides = [1, 1]} : vector<8x8xf32> to vector<8x1xf32>
    %58 = vector.extract_strided_slice %6 {offsets = [0, 5], sizes = [8, 1], strides = [1, 1]} : vector<8x8xf32> to vector<8x1xf32>
    %59 = arith.cmpf ogt, %57, %58 : vector<8x1xf32>
    %60 = arith.extui %59 : vector<8x1xi1> to vector<8x1xi32>
    %61 = arith.sitofp %60 : vector<8x1xi32> to vector<8x1xf32>
    %c5 = arith.constant 5 : index
    %c0_13 = arith.constant 0 : index
    %62 = vector.load %arg3[%c5, %c0_13] : memref<8x8xf32, #tpu.memory_space<vmem>>, vector<1x8xf32>
    %63 = vector.broadcast %61 : vector<8x1xf32> to vector<8x8xf32>
    %64 = vector.broadcast %62 : vector<1x8xf32> to vector<8x8xf32>
    %65 = arith.mulf %63, %64 : vector<8x8xf32>
    %66 = arith.addf %56, %65 : vector<8x8xf32>
    %67 = vector.extract_strided_slice %66 {offsets = [0, 6], sizes = [8, 1], strides = [1, 1]} : vector<8x8xf32> to vector<8x1xf32>
    %68 = vector.extract_strided_slice %6 {offsets = [0, 6], sizes = [8, 1], strides = [1, 1]} : vector<8x8xf32> to vector<8x1xf32>
    %69 = arith.cmpf ogt, %67, %68 : vector<8x1xf32>
    %70 = arith.extui %69 : vector<8x1xi1> to vector<8x1xi32>
    %71 = arith.sitofp %70 : vector<8x1xi32> to vector<8x1xf32>
    %c6 = arith.constant 6 : index
    %c0_14 = arith.constant 0 : index
    %72 = vector.load %arg3[%c6, %c0_14] : memref<8x8xf32, #tpu.memory_space<vmem>>, vector<1x8xf32>
    %73 = vector.broadcast %71 : vector<8x1xf32> to vector<8x8xf32>
    %74 = vector.broadcast %72 : vector<1x8xf32> to vector<8x8xf32>
    %75 = arith.mulf %73, %74 : vector<8x8xf32>
    %76 = arith.addf %66, %75 : vector<8x8xf32>
    %c0_15 = arith.constant 0 : index
    %c0_16 = arith.constant 0 : index
    %77 = vector.load %arg7[%c0_15, %c0_16] : memref<8x8xf32, #tpu.memory_space<vmem>>, vector<8x8xf32>
    tpu.vector_store %arg7[%c0_15, %c0_16], %76 {strides = array<i32>} : memref<8x8xf32, #tpu.memory_space<vmem>>, vector<8x8xf32>,
    %78 = arith.cmpf ogt, %76, %6 : vector<8x8xf32>
    %79 = arith.extui %78 : vector<8x8xi1> to vector<8x8xi32>
    %80 = arith.sitofp %79 : vector<8x8xi32> to vector<8x8xf32>
    %c0_17 = arith.constant 0 : index
    %c0_18 = arith.constant 0 : index
    %81 = vector.load %arg6[%c0_17, %c0_18] : memref<8x8xf32, #tpu.memory_space<vmem>>, vector<8x8xf32>
    tpu.vector_store %arg6[%c0_17, %c0_18], %80 {strides = array<i32>} : memref<8x8xf32, #tpu.memory_space<vmem>>, vector<8x8xf32>,
    return
  }
  func.func @transform_0(%arg0: i32) -> (i32, i32) {
    %c0_i32 = arith.constant 0 : i32
    %c0_i32_0 = arith.constant 0 : i32
    %c0_i32_1 = arith.constant 0 : i32
    return %c0_i32, %c0_i32_0 : i32, i32
  }
  func.func @transform_1(%arg0: i32) -> (i32, i32) {
    %c0_i32 = arith.constant 0 : i32
    %c0_i32_0 = arith.constant 0 : i32
    %c0_i32_1 = arith.constant 0 : i32
    return %c0_i32, %c0_i32_0 : i32, i32
  }
  func.func @transform_2(%arg0: i32) -> (i32, i32) {
    %c0_i32 = arith.constant 0 : i32
    %c0_i32_0 = arith.constant 0 : i32
    %c0_i32_1 = arith.constant 0 : i32
    return %c0_i32, %c0_i32_0 : i32, i32
  }
  func.func @transform_3(%arg0: i32) -> (i32, i32) {
    %c0_i32 = arith.constant 0 : i32
    %c0_i32_0 = arith.constant 0 : i32
    %c0_i32_1 = arith.constant 0 : i32
    return %c0_i32, %c0_i32_0 : i32, i32
  }
  func.func @transform_4(%arg0: i32) -> (i32, i32) {
    %c0_i32 = arith.constant 0 : i32
    %c0_i32_0 = arith.constant 0 : i32
    %c0_i32_1 = arith.constant 0 : i32
    return %c0_i32, %c0_i32_0 : i32, i32
  }
  func.func @transform_5(%arg0: i32) -> (i32, i32) {
    %c0_i32 = arith.constant 0 : i32
    %c0_i32_0 = arith.constant 0 : i32
    %c0_i32_1 = arith.constant 0 : i32
    return %c0_i32, %c0_i32_0 : i32, i32
  }
  func.func @transform_6(%arg0: i32) -> (i32, i32) {
    %c0_i32 = arith.constant 0 : i32
    %c0_i32_0 = arith.constant 0 : i32
    %c0_i32_1 = arith.constant 0 : i32
    return %c0_i32, %c0_i32_0 : i32, i32
  }
}

</mosaic_0001>

<llo_original>
// kernel: tpu_custom_call.1
$region0: #{tpu_custom_call.1}
  #allocation0 [shape = 'u32[]', space=smem, size = 0x4, offset = 0x4, fixed_abs, tag = 'smem constant byte address 0x4 - core index']
  #allocation1 [shape = 'u32[72,128]{1,0:T(1,128)}', space=vmem, size = 0x9000, scoped, tag = 'internal scratch']
  %s0 = inlined_call_operand.vmem [shape: f32[8,4], index: 0, kind: input, shape index: {}]
  %s1 = inlined_call_operand.vmem [shape: f32[8,4], index: 1, kind: input, shape index: {}]
  %s2 = inlined_call_operand.vmem [shape: f32[8,8], index: 2, kind: input, shape index: {}]
  %s3 = inlined_call_operand.vmem [shape: f32[1,8], index: 3, kind: input, shape index: {}]
  %s4 = inlined_call_operand.vmem [shape: f32[8,8], index: 4, kind: input, shape index: {}]
  %s5 = inlined_call_operand.hbm [shape: f32[8,8], index: 5, kind: output, shape index: {0}]
  %s6 = inlined_call_operand.hbm [shape: f32[8,8], index: 6, kind: output, shape index: {1}]
  %7 = xla_tuple %s5, %s6
  %s8 = sld [smem:[#allocation0]]
  $region38: #{tpu_custom_call.1} parent=0
    _
  %s10 = ssub.s32 1, %s8
  %s11 = scalar_select 0, %s10, %s8
  $region1: #{tpu_custom_call.1} parent=0
    #allocation2 [shape = 'u8[4096]{0}', space=vmem, size = 0x1000, scoped, tag = 'output window, operand 0, single buffered']
    #allocation3 [shape = 's32[1]{0}', space=sflag, size = 0x4, scoped, tag = 'scoped memory for tpu_custom_call.1']
    #allocation4 [shape = 'u8[4096]{0}', space=vmem, size = 0x1000, scoped, tag = 'output window, operand 1, single buffered']
    #allocation5 [shape = 's32[1]{0}', space=sflag, size = 0x4, scoped, tag = 'scoped memory for tpu_custom_call.1']
    %12 = vsyncpa [#allocation3], 0
    %13 = vsyncpa [#allocation5], 0
    // Predicated region
    $region2: #{tpu_custom_call.1} parent=1 // pred_check
      _
    $region3: #{tpu_custom_call.1} parent=1 // pred_check_branch
      %15 = sbr.rel (0) target = $region5
    $region4: #{tpu_custom_call.1} parent=1 // pred_region
      _
    $region5: #{tpu_custom_call.1} parent=1 // pred_fallthru
      _
    // Predicated region
    $region6: #{tpu_custom_call.1} parent=1 // pred_check
      _
    $region7: #{tpu_custom_call.1} parent=1 // pred_check_branch
      %17 = sbr.rel (0) target = $region9
    $region8: #{tpu_custom_call.1} parent=1 // pred_region
      _
    $region9: #{tpu_custom_call.1} parent=1 // pred_fallthru
      _
    // Predicated region
    $region10: #{tpu_custom_call.1} parent=1 // pred_check
      _
    $region11: #{tpu_custom_call.1} parent=1 // pred_check_branch
      %19 = sbr.rel (0) target = $region13
    $region12: #{tpu_custom_call.1} parent=1 // pred_region
      _
    $region13: #{tpu_custom_call.1} parent=1 // pred_fallthru
      _
    // Predicated region
    $region14: #{tpu_custom_call.1} parent=1 // pred_check
      _
    $region15: #{tpu_custom_call.1} parent=1 // pred_check_branch
      %21 = sbr.rel (0) target = $region17
    $region16: #{tpu_custom_call.1} parent=1 // pred_region
      _
    $region17: #{tpu_custom_call.1} parent=1 // pred_fallthru
      _
    // Predicated region
    $region18: #{tpu_custom_call.1} parent=1 // pred_check
      _
    $region19: #{tpu_custom_call.1} parent=1 // pred_check_branch
      %23 = sbr.rel (0) target = $region21
    $region20: #{tpu_custom_call.1} parent=1 // pred_region
      _
    $region21: #{tpu_custom_call.1} parent=1 // pred_fallthru
      _
    %v24 = vld [vmem:[%s0] sm:$0xff]
    %v25 = vld [vmem:[%s1] sm:$0xff]
    %v26 = vld [vmem:[%s3] sm:$0x1]
    %v28 = vperm.slane %v26, 0
    %vm30 = vcmask 31744
    %v32 = vsel %vm30, %v24, 0
    %v35 = vsel %vm30, %v25, 0
    %37 = vmatpush.xpose.msra.mxu0 0.0
    %38 = vmatpush.xpose.msra.mxu0 0.0
    %39 = vmatpush.xpose.msra.mxu0 0.0
    %40 = vmatpush.xpose.msra.mxu0 0.0
    %41 = vmatpush.xpose.msra.mxu0 0.0
    %42 = vmatpush.xpose.msra.mxu0 0.0
    %43 = vmatpush.xpose.msra.mxu0 0.0
    %44 = vmatpush.xpose.msra.mxu0 0.0
    %45 = vmatpush.xpose.msra.mxu0 0.0
    %46 = vmatpush.xpose.msra.mxu0 0.0
    %47 = vmatpush.xpose.msra.mxu0 0.0
    %48 = vmatpush.xpose.msra.mxu0 0.0
    %49 = vmatpush.xpose.msra.mxu0 0.0
    %50 = vmatpush.xpose.msra.mxu0 0.0
    %51 = vmatpush.xpose.msra.mxu0 0.0
    %52 = vmatpush.xpose.msra.mxu0 %v35
    %53 = vmatmul.f32.gmra.mxu0 %v32
    %v54 = vpop.f32.mrf.mxu0
    %v55 = vadd.f32 %v28, %v54
    %56 = vdwg.mxu0
    %v57 = vld [vmem:[%s4] sm:$0xff]
    %vm58 = vcmp.gt.f32.partialorder %v55, %v57
    %v59 = vsel %vm58, 1, 0
    %v60 = vcvt.s32.f32 %v59
    %v61 = vld [vmem:[%s2] sm:$0x1]
    %63 = vset.pattern.permute.xlu0 0
    %64 = vperm.xlu0 %63, %v60
    %v65 = vpop.permute.xlu0 %64
    %v67 = vperm.slane %v61, 0
    %v68 = vmul.f32 %v65, %v67
    %v69 = vadd.f32 %v55, %v68
    %vm70 = vcmp.gt.f32.partialorder %v69, %v57
    %v71 = vsel %vm70, 1, 0
    %v72 = vcvt.s32.f32 %v71
    %v73 = vld [vmem:[%s2 + $0x1] sm:$0x1]
    %75 = vset.pattern.permute.xlu0 1
    %76 = vperm.xlu0 %75, %v72
    %v77 = vpop.permute.xlu0 %76
    %v79 = vperm.slane %v73, 0
    %v80 = vmul.f32 %v77, %v79
    %v81 = vadd.f32 %v69, %v80
    %vm82 = vcmp.gt.f32.partialorder %v81, %v57
    %v83 = vsel %vm82, 1, 0
    %v84 = vcvt.s32.f32 %v83
    %v85 = vld [vmem:[%s2 + $0x2] sm:$0x1]
    %87 = vset.pattern.permute.xlu0 2
    %88 = vperm.xlu0 %87, %v84
    %v89 = vpop.permute.xlu0 %88
    %v91 = vperm.slane %v85, 0
    %v92 = vmul.f32 %v89, %v91
    %v93 = vadd.f32 %v81, %v92
    %vm94 = vcmp.gt.f32.partialorder %v93, %v57
    %v95 = vsel %vm94, 1, 0
    %v96 = vcvt.s32.f32 %v95
    %v97 = vld [vmem:[%s2 + $0x3] sm:$0x1]
    %99 = vset.pattern.permute.xlu0 3
    %100 = vperm.xlu0 %99, %v96
    %v101 = vpop.permute.xlu0 %100
    %v103 = vperm.slane %v97, 0
    %v104 = vmul.f32 %v101, %v103
    %v105 = vadd.f32 %v93, %v104
    %vm106 = vcmp.gt.f32.partialorder %v105, %v57
    %v107 = vsel %vm106, 1, 0
    %v108 = vcvt.s32.f32 %v107
    %v109 = vld [vmem:[%s2 + $0x4] sm:$0x1]
    %111 = vset.pattern.permute.xlu0 4
    %112 = vperm.xlu0 %111, %v108
    %v113 = vpop.permute.xlu0 %112
    %v115 = vperm.slane %v109, 0
    %v116 = vmul.f32 %v113, %v115
    %v117 = vadd.f32 %v105, %v116
    %vm118 = vcmp.gt.f32.partialorder %v117, %v57
    %v119 = vsel %vm118, 1, 0
    %v120 = vcvt.s32.f32 %v119
    %v121 = vld [vmem:[%s2 + $0x5] sm:$0x1]
    %123 = vset.pattern.permute.xlu0 5
    %124 = vperm.xlu0 %123, %v120
    %v125 = vpop.permute.xlu0 %124
    %v127 = vperm.slane %v121, 0
    %v128 = vmul.f32 %v125, %v127
    %v129 = vadd.f32 %v117, %v128
    %vm130 = vcmp.gt.f32.partialorder %v129, %v57
    %v131 = vsel %vm130, 1, 0
    %v132 = vcvt.s32.f32 %v131
    %v133 = vld [vmem:[%s2 + $0x6] sm:$0x1]
    %135 = vset.pattern.permute.xlu0 6
    %136 = vperm.xlu0 %135, %v132
    %v137 = vpop.permute.xlu0 %136
    %v139 = vperm.slane %v133, 0
    %v140 = vmul.f32 %v137, %v139
    %v141 = vadd.f32 %v129, %v140
    %vm142 = vcmask 64512
    %143 = vst.msk [vmem:[#allocation4] sm:$0xff] %vm142, %v141
    %vm144 = vcmp.gt.f32.partialorder %v141, %v57
    %v145 = vsel %vm144, 1, 0
    %v146 = vcvt.s32.f32 %v145
    %147 = vst.msk [vmem:[#allocation2] sm:$0xff] %vm142, %v146
    // Predicated region
    $region22: #{tpu_custom_call.1} parent=1 // pred_check
      _
    $region23: #{tpu_custom_call.1} parent=1 // pred_check_branch
      %149 = sbr.rel (0) target = $region25
    $region24: #{tpu_custom_call.1} parent=1 // pred_region
      %151 = vsyncadd [#allocation3], 0
      %s153 = sshll.u32 [#allocation2], 4
      %s154 = int_to_ptr.vmem [resolvable:$true] %s153
      %s155 = sshll.u32 %s5, 4
      %s156 = int_to_ptr.hbm [resolvable:$true] %s155
      %158 = dma.vmem_to_hbm [thread:$0]  %s154, 128, %s156, [#allocation3]
    $region25: #{tpu_custom_call.1} parent=1 // pred_fallthru
      _
    // Predicated region
    $region26: #{tpu_custom_call.1} parent=1 // pred_check
      _
    $region27: #{tpu_custom_call.1} parent=1 // pred_check_branch
      %160 = sbr.rel (0) target = $region29
    $region28: #{tpu_custom_call.1} parent=1 // pred_region
      %162 = vsyncadd [#allocation5], 0
      %s164 = sshll.u32 [#allocation4], 4
      %s165 = int_to_ptr.vmem [resolvable:$true] %s164
      %s166 = sshll.u32 %s6, 4
      %s167 = int_to_ptr.hbm [resolvable:$true] %s166
      %169 = dma.vmem_to_hbm [thread:$0]  %s165, 128, %s167, [#allocation5]
    $region29: #{tpu_custom_call.1} parent=1 // pred_fallthru
      _
    // Predicated region
    $region30: #{tpu_custom_call.1} parent=1 // pred_check
      _
    $region31: #{tpu_custom_call.1} parent=1 // pred_check_branch
      %171 = sbr.rel (0) target = $region33
    $region32: #{tpu_custom_call.1} parent=1 // pred_region
      %173 = dma.done [#allocation3], 128
    $region33: #{tpu_custom_call.1} parent=1 // pred_fallthru
      _
    // Predicated region
    $region34: #{tpu_custom_call.1} parent=1 // pred_check
      _
    $region35: #{tpu_custom_call.1} parent=1 // pred_check_branch
      %175 = sbr.rel (0) target = $region37
    $region36: #{tpu_custom_call.1} parent=1 // pred_region
      %177 = dma.done [#allocation5], 128
    $region37: #{tpu_custom_call.1} parent=1 // pred_fallthru
      _
    %178 = vsyncpa [#allocation3], 1
    %179 = vsyncpa [#allocation5], 1

</llo_original>
